<compile_context>
chip_gen: v7x
topology: tpu7x:2x2x1
jax: 0.10.0
libtpu: 0.0.40
codegen_flags: <defaults>
</compile_context>

<pallas_src>
import math

import jax
import jax.numpy as jnp
import numpy as np
from jax import lax
from jax.experimental import pallas as pl
from jax.experimental.pallas import tpu as pltpu


def _tap_masks(H, W):
    """(9, H*W) f32 validity masks: 1.0 inside the image, 0.0 where a rolled
    3x3 tap would wrap across an image border (i.e. where zero padding is)."""
    yy, xx = np.meshgrid(np.arange(H), np.arange(W), indexing="ij")
    yy = yy.reshape(-1)
    xx = xx.reshape(-1)
    masks = np.ones((9, H * W), np.float32)
    for dy in range(3):
        for dx in range(3):
            valid = np.ones(H * W, bool)
            if dy == 0:
                valid &= yy >= 1
            elif dy == 2:
                valid &= yy <= H - 2
            if dx == 0:
                valid &= xx >= 1
            elif dx == 2:
                valid &= xx <= W - 2
            masks[dy * 3 + dx] = valid.astype(np.float32)
    return masks


def _make_kernel(H, W, Cin, G, L):
    def conv3x3(x, C, mexp_ref, w_ref, bias, xcol_ref):
        # Masked-roll im2col: 9 rolled taps written straight into the VMEM
        # scratch (no concat), masks pre-expanded to (9*C, L) so there are no
        # sublane broadcasts, then one MXU matmul with K = 9*C.
        for dy in range(3):
            for dx in range(3):
                off = (dy - 1) * W + (dx - 1)
                i = dy * 3 + dx
                t = x if off == 0 else pltpu.roll(x, shift=(-off) % L, axis=1)
                if (dy, dx) != (1, 1):
                    t = t * mexp_ref[i * C:(i + 1) * C, :]
                xcol_ref[i * C:(i + 1) * C, :] = t
        y = jnp.dot(w_ref[...], xcol_ref[0:9 * C, :],
                    preferred_element_type=jnp.float32) + bias
        return jnp.maximum(y, 0.0)

    def kernel(x_ref, mb_ref, mc_ref, wab_ref, bb_ref, wc_ref, bc_ref,
               out_ref, xcol_ref):
        x = x_ref[0]                                    # (Cin, L), lane-dense
        # cb_a (1x1 conv + BN) is folded into cb_b's weights; bb_ref is the
        # per-pixel bias map accounting for zero padding at the borders.
        b = conv3x3(x, Cin, mb_ref, wab_ref, bb_ref[...], xcol_ref)
        c = conv3x3(b, G, mc_ref, wc_ref, bc_ref[...], xcol_ref)
        # out = concat((x, cb_b_out, cb_c_out), channel): one aligned store.
        out_ref[0] = jnp.concatenate([x, b, c], axis=0)

    return kernel


def _default_grid_steps(N):
    # v7x has 2 TensorCores per chip -> shard batch across them; single-TC
    # chips (v5e/v6e) do best with the whole batch folded into one grid step.
    try:
        kind = jax.devices()[0].device_kind.lower()
    except Exception:
        kind = ""
    cores = 2 if "v7" in kind else 1
    return max(math.gcd(N, cores), 1)


def dense_block(x_nchw, params, *, grid_steps=None):
    """x_nchw: (N, Cin, H, W) f32; params from pack_params; returns NCHW out."""
    w_ab, v_b, tb, wc, tc = params
    N, Cin, H, W = x_nchw.shape
    G = w_ab.shape[0]
    Cout = Cin + 2 * G
    HW = H * W

    g = grid_steps if grid_steps is not None else _default_grid_steps(N)
    g = max(math.gcd(N, g), 1)            # grid steps must divide N
    nb = N // g
    L = nb * HW                           # lanes per grid step

    # Lane-dense (C, nb*HW) slabs: nb batch images folded into the lane axis.
    x_slab = (x_nchw.reshape(g, nb, Cin, HW)
              .transpose(0, 2, 1, 3).reshape(g, Cin, L))

    masks = _tap_masks(H, W)                                      # (9, HW)
    mexp_b = jnp.asarray(np.tile(np.repeat(masks, Cin, axis=0), (1, nb)))
    mexp_c = jnp.asarray(np.tile(np.repeat(masks, G, axis=0), (1, nb)))
    # Per-pixel bias map for the folded cb_a+cb_b conv: only the taps valid at
    # a pixel contribute cb_a's (BN-folded) bias because of zero padding.
    bias_b = jnp.tile(tb + v_b @ jnp.asarray(masks), (1, nb))     # (G, L)

    kernel = _make_kernel(H, W, Cin, G, L)
    full = lambda a: pl.BlockSpec(a.shape, lambda n: (0,) * a.ndim)

    out = pl.pallas_call(
        kernel,
        out_shape=jax.ShapeDtypeStruct((g, Cout, L), jnp.float32),
        grid_spec=pltpu.PrefetchScalarGridSpec(
            num_scalar_prefetch=0,
            grid=(g,),
            in_specs=[
                pl.BlockSpec((1, Cin, L), lambda n: (n, 0, 0)),
                full(mexp_b), full(mexp_c),
                full(w_ab), full(bias_b),
                full(wc), full(tc),
            ],
            out_specs=pl.BlockSpec((1, Cout, L), lambda n: (n, 0, 0)),
            scratch_shapes=[pltpu.VMEM((9 * max(Cin, G), L), jnp.float32)],
        ),
        compiler_params=pltpu.CompilerParams(
            dimension_semantics=("parallel",)),
    )(x_slab, mexp_b, mexp_c, w_ab, bias_b, wc, tc)

    return (out.reshape(g, Cout, nb, HW)
            .transpose(0, 2, 1, 3).reshape(N, Cout, H, W))


def fold_bn(gamma, beta, mean, var, eps):
    s = gamma / jnp.sqrt(var + eps)
    t = beta - mean * s
    return s, t


def pack_params(wa_hwio, bn_a, wb_hwio, bn_b, wc_hwio, bn_c):
    """Fold eval-mode BN into the conv weights and fold cb_a into cb_b.

    Returns (w_ab, v_b, tb, wc, tc):
      w_ab : (G, 9*Cin)  cb_b 3x3 weights with BN_b scale and cb_a folded in
      v_b  : (G, 9)      per-tap contribution of cb_a's bias (gated per pixel)
      tb   : (G, 1)      BN_b bias
      wc   : (G, 9*G)    cb_c 3x3 weights with BN_c scale folded in
      tc   : (G, 1)      BN_c bias
    """
    Cin, Cint = wa_hwio.shape[2], wa_hwio.shape[3]
    G = wb_hwio.shape[3]
    sa, ta = fold_bn(*bn_a, eps=1e-3)   # cb_a uses BatchNorm2d(eps=0.001)
    sb, tb = fold_bn(*bn_b, eps=1e-5)
    sc, tc = fold_bn(*bn_c, eps=1e-5)

    wa = wa_hwio.reshape(Cin, Cint).T * sa[:, None]              # (Cint, Cin)
    wb = (jnp.transpose(wb_hwio, (3, 0, 1, 2)).reshape(G, 9, Cint)
          * sb[:, None, None])                                   # (G, 9, Cint)
    w_ab = jnp.einsum("gti,ic->gtc", wb, wa).reshape(G, 9 * Cin)
    v_b = jnp.einsum("gti,i->gt", wb, ta)                        # (G, 9)
    wc = jnp.transpose(wc_hwio, (3, 0, 1, 2)).reshape(G, 9 * G) * sc[:, None]
    return w_ab, v_b, tb.reshape(G, 1), wc, tc.reshape(G, 1)


def ref_dense_block(x_nchw, wa_hwio, bn_a, wb_hwio, bn_b, wc_hwio, bn_c):
    def conv(x, w, pad):
        return lax.conv_general_dilated(
            x, w, (1, 1), pad, dimension_numbers=("NCHW", "HWIO", "NCHW"))

    def bn(y, p, eps):
        gamma, beta, mean, var = (v.reshape(1, -1, 1, 1) for v in p)
        return (y - mean) / jnp.sqrt(var + eps) * gamma + beta

    a = bn(conv(x_nchw, wa_hwio, "VALID"), bn_a, 1e-3)
    b = jax.nn.relu(bn(conv(a, wb_hwio, "SAME"), bn_b, 1e-5))
    c = jax.nn.relu(bn(conv(b, wc_hwio, "SAME"), bn_c, 1e-5))
    return jnp.concatenate([x_nchw, b, c], axis=1)


if __name__ == "__main__":
    # Shapes implied by DenseBlock(inp, inter_channel, growth_rate)
    N, Cin, H, W = 2, 4, 16, 16
    Cint, G = 8, 8

    key = jax.random.PRNGKey(0)
    ks = jax.random.split(key, 8)

    # Input stays in PyTorch NCHW layout end to end.
    x_nchw = jax.random.normal(ks[0], (N, Cin, H, W), jnp.float32)

    # Conv weights (HWIO) and eval-mode BN params (running stats).
    wa_hwio = 0.2 * jax.random.normal(ks[1], (1, 1, Cin, Cint), jnp.float32)
    wb_hwio = 0.2 * jax.random.normal(ks[2], (3, 3, Cint, G), jnp.float32)
    wc_hwio = 0.2 * jax.random.normal(ks[3], (3, 3, G, G), jnp.float32)

    def bn_params(k, c):
        k1, k2, k3, k4 = jax.random.split(k, 4)
        gamma = jax.random.uniform(k1, (c,), jnp.float32, 0.5, 1.5)
        beta = 0.1 * jax.random.normal(k2, (c,), jnp.float32)
        mean = 0.1 * jax.random.normal(k3, (c,), jnp.float32)
        var = jax.random.uniform(k4, (c,), jnp.float32, 0.5, 1.5)
        return gamma, beta, mean, var

    bn_a = bn_params(ks[4], Cint)
    bn_b = bn_params(ks[5], G)
    bn_c = bn_params(ks[6], G)

    params = pack_params(wa_hwio, bn_a, wb_hwio, bn_b, wc_hwio, bn_c)

    out = dense_block(x_nchw, params)
    out = jax.block_until_ready(out)

    ref = ref_dense_block(x_nchw, wa_hwio, bn_a, wb_hwio, bn_b, wc_hwio, bn_c)
    np.testing.assert_allclose(np.asarray(out), np.asarray(ref),
                               rtol=1e-4, atol=1e-4)

    assert out.shape == (N, Cin + 2 * G, H, W)
    print("KERNEL_OK")
</pallas_src>

<mosaic_0001>
module attributes {stable_mosaic.version = 11 : i64} {
  func.func @kernel(%arg0: i32, %arg1: memref<1x4x512xf32, #tpu.memory_space<vmem>>, %arg2: memref<36x512xf32, #tpu.memory_space<vmem>>, %arg3: memref<72x512xf32, #tpu.memory_space<vmem>>, %arg4: memref<8x36xf32, #tpu.memory_space<vmem>>, %arg5: memref<8x512xf32, #tpu.memory_space<vmem>>, %arg6: memref<8x72xf32, #tpu.memory_space<vmem>>, %arg7: memref<8x1xf32, #tpu.memory_space<vmem>>, %arg8: memref<1x20x512xf32, #tpu.memory_space<vmem>>, %arg9: memref<72x512xf32, #tpu.memory_space<vmem>>) attributes {dimension_semantics = [#tpu.dimension_semantics<parallel>], iteration_bounds = array<i64: 1>, scalar_prefetch = 0 : i64, scratch_operands = 1 : i64, tpu.core_type = #tpu.core_type<tc>, window_params = [{transform_indices = @transform_0, window_bounds = array<i64: 1, 4, 512>}, {pipeline_mode = #tpu.pipeline_mode<synchronous>, transform_indices = @transform_1, window_bounds = array<i64: 36, 512>}, {pipeline_mode = #tpu.pipeline_mode<synchronous>, transform_indices = @transform_2, window_bounds = array<i64: 72, 512>}, {pipeline_mode = #tpu.pipeline_mode<synchronous>, transform_indices = @transform_3, window_bounds = array<i64: 8, 36>}, {pipeline_mode = #tpu.pipeline_mode<synchronous>, transform_indices = @transform_4, window_bounds = array<i64: 8, 512>}, {pipeline_mode = #tpu.pipeline_mode<synchronous>, transform_indices = @transform_5, window_bounds = array<i64: 8, 72>}, {pipeline_mode = #tpu.pipeline_mode<synchronous>, transform_indices = @transform_6, window_bounds = array<i64: 8, 1>}, {transform_indices = @transform_7, window_bounds = array<i64: 1, 20, 512>}]} {
    %c0 = arith.constant 0 : index
    %c0_0 = arith.constant 0 : index
    %c0_1 = arith.constant 0 : index
    %0 = vector.load %arg1[%c0, %c0_0, %c0_1] : memref<1x4x512xf32, #tpu.memory_space<vmem>>, vector<1x4x512xf32>
    %1 = vector.shape_cast %0 : vector<1x4x512xf32> to vector<4x512xf32>
    %c0_2 = arith.constant 0 : index
    %c0_3 = arith.constant 0 : index
    %2 = vector.load %arg5[%c0_2, %c0_3] : memref<8x512xf32, #tpu.memory_space<vmem>>, vector<8x512xf32>
    %c17_i32 = arith.constant 17 : i32
    %3 = tpu.dynamic_rotate %1 by %c17_i32 dim 1 : vector<4x512xf32>, i32 -> vector<4x512xf32>
    %c0_4 = arith.constant 0 : index
    %c0_5 = arith.constant 0 : index
    %4 = vector.load %arg2[%c0_4, %c0_5] : memref<36x512xf32, #tpu.memory_space<vmem>>, vector<4x512xf32>
    %5 = arith.mulf %3, %4 : vector<4x512xf32>
    %c0_6 = arith.constant 0 : index
    %c0_7 = arith.constant 0 : index
    %6 = vector.load %arg9[%c0_6, %c0_7] : memref<72x512xf32, #tpu.memory_space<vmem>>, vector<4x512xf32>
    tpu.vector_store %arg9[%c0_6, %c0_7], %5 {strides = array<i32>} : memref<72x512xf32, #tpu.memory_space<vmem>>, vector<4x512xf32>,
    %c16_i32 = arith.constant 16 : i32
    %7 = tpu.dynamic_rotate %1 by %c16_i32 dim 1 : vector<4x512xf32>, i32 -> vector<4x512xf32>
    %c4 = arith.constant 4 : index
    %c0_8 = arith.constant 0 : index
    %8 = vector.load %arg2[%c4, %c0_8] : memref<36x512xf32, #tpu.memory_space<vmem>>, vector<4x512xf32>
    %9 = arith.mulf %7, %8 : vector<4x512xf32>
    %c4_9 = arith.constant 4 : index
    %c0_10 = arith.constant 0 : index
    %10 = vector.load %arg9[%c4_9, %c0_10] : memref<72x512xf32, #tpu.memory_space<vmem>>, vector<4x512xf32>
    tpu.vector_store %arg9[%c4_9, %c0_10], %9 {strides = array<i32>} : memref<72x512xf32, #tpu.memory_space<vmem>>, vector<4x512xf32>,
    %c15_i32 = arith.constant 15 : i32
    %11 = tpu.dynamic_rotate %1 by %c15_i32 dim 1 : vector<4x512xf32>, i32 -> vector<4x512xf32>
    %c8 = arith.constant 8 : index
    %c0_11 = arith.constant 0 : index
    %12 = vector.load %arg2[%c8, %c0_11] : memref<36x512xf32, #tpu.memory_space<vmem>>, vector<4x512xf32>
    %13 = arith.mulf %11, %12 : vector<4x512xf32>
    %c8_12 = arith.constant 8 : index
    %c0_13 = arith.constant 0 : index
    %14 = vector.load %arg9[%c8_12, %c0_13] : memref<72x512xf32, #tpu.memory_space<vmem>>, vector<4x512xf32>
    tpu.vector_store %arg9[%c8_12, %c0_13], %13 {strides = array<i32>} : memref<72x512xf32, #tpu.memory_space<vmem>>, vector<4x512xf32>,
    %c1_i32 = arith.constant 1 : i32
    %15 = tpu.dynamic_rotate %1 by %c1_i32 dim 1 : vector<4x512xf32>, i32 -> vector<4x512xf32>
    %c12 = arith.constant 12 : index
    %c0_14 = arith.constant 0 : index
    %16 = vector.load %arg2[%c12, %c0_14] : memref<36x512xf32, #tpu.memory_space<vmem>>, vector<4x512xf32>
    %17 = arith.mulf %15, %16 : vector<4x512xf32>
    %c12_15 = arith.constant 12 : index
    %c0_16 = arith.constant 0 : index
    %18 = vector.load %arg9[%c12_15, %c0_16] : memref<72x512xf32, #tpu.memory_space<vmem>>, vector<4x512xf32>
    tpu.vector_store %arg9[%c12_15, %c0_16], %17 {strides = array<i32>} : memref<72x512xf32, #tpu.memory_space<vmem>>, vector<4x512xf32>,
    %c16 = arith.constant 16 : index
    %c0_17 = arith.constant 0 : index
    %19 = vector.load %arg9[%c16, %c0_17] : memref<72x512xf32, #tpu.memory_space<vmem>>, vector<4x512xf32>
    tpu.vector_store %arg9[%c16, %c0_17], %1 {strides = array<i32>} : memref<72x512xf32, #tpu.memory_space<vmem>>, vector<4x512xf32>,
    %c511_i32 = arith.constant 511 : i32
    %20 = tpu.dynamic_rotate %1 by %c511_i32 dim 1 : vector<4x512xf32>, i32 -> vector<4x512xf32>
    %c20 = arith.constant 20 : index
    %c0_18 = arith.constant 0 : index
    %21 = vector.load %arg2[%c20, %c0_18] : memref<36x512xf32, #tpu.memory_space<vmem>>, vector<4x512xf32>
    %22 = arith.mulf %20, %21 : vector<4x512xf32>
    %c20_19 = arith.constant 20 : index
    %c0_20 = arith.constant 0 : index
    %23 = vector.load %arg9[%c20_19, %c0_20] : memref<72x512xf32, #tpu.memory_space<vmem>>, vector<4x512xf32>
    tpu.vector_store %arg9[%c20_19, %c0_20], %22 {strides = array<i32>} : memref<72x512xf32, #tpu.memory_space<vmem>>, vector<4x512xf32>,
    %c497_i32 = arith.constant 497 : i32
    %24 = tpu.dynamic_rotate %1 by %c497_i32 dim 1 : vector<4x512xf32>, i32 -> vector<4x512xf32>
    %c24 = arith.constant 24 : index
    %c0_21 = arith.constant 0 : index
    %25 = vector.load %arg2[%c24, %c0_21] : memref<36x512xf32, #tpu.memory_space<vmem>>, vector<4x512xf32>
    %26 = arith.mulf %24, %25 : vector<4x512xf32>
    %c24_22 = arith.constant 24 : index
    %c0_23 = arith.constant 0 : index
    %27 = vector.load %arg9[%c24_22, %c0_23] : memref<72x512xf32, #tpu.memory_space<vmem>>, vector<4x512xf32>
    tpu.vector_store %arg9[%c24_22, %c0_23], %26 {strides = array<i32>} : memref<72x512xf32, #tpu.memory_space<vmem>>, vector<4x512xf32>,
    %c496_i32 = arith.constant 496 : i32
    %28 = tpu.dynamic_rotate %1 by %c496_i32 dim 1 : vector<4x512xf32>, i32 -> vector<4x512xf32>
    %c28 = arith.constant 28 : index
    %c0_24 = arith.constant 0 : index
    %29 = vector.load %arg2[%c28, %c0_24] : memref<36x512xf32, #tpu.memory_space<vmem>>, vector<4x512xf32>
    %30 = arith.mulf %28, %29 : vector<4x512xf32>
    %c28_25 = arith.constant 28 : index
    %c0_26 = arith.constant 0 : index
    %31 = vector.load %arg9[%c28_25, %c0_26] : memref<72x512xf32, #tpu.memory_space<vmem>>, vector<4x512xf32>
    tpu.vector_store %arg9[%c28_25, %c0_26], %30 {strides = array<i32>} : memref<72x512xf32, #tpu.memory_space<vmem>>, vector<4x512xf32>,
    %c495_i32 = arith.constant 495 : i32
    %32 = tpu.dynamic_rotate %1 by %c495_i32 dim 1 : vector<4x512xf32>, i32 -> vector<4x512xf32>
    %c32 = arith.constant 32 : index
    %c0_27 = arith.constant 0 : index
    %33 = vector.load %arg2[%c32, %c0_27] : memref<36x512xf32, #tpu.memory_space<vmem>>, vector<4x512xf32>
    %34 = arith.mulf %32, %33 : vector<4x512xf32>
    %c32_28 = arith.constant 32 : index
    %c0_29 = arith.constant 0 : index
    %35 = vector.load %arg9[%c32_28, %c0_29] : memref<72x512xf32, #tpu.memory_space<vmem>>, vector<4x512xf32>
    tpu.vector_store %arg9[%c32_28, %c0_29], %34 {strides = array<i32>} : memref<72x512xf32, #tpu.memory_space<vmem>>, vector<4x512xf32>,
    %c0_30 = arith.constant 0 : index
    %c0_31 = arith.constant 0 : index
    %36 = vector.load %arg4[%c0_30, %c0_31] : memref<8x36xf32, #tpu.memory_space<vmem>>, vector<8x36xf32>
    %c0_32 = arith.constant 0 : index
    %c0_33 = arith.constant 0 : index
    %37 = vector.load %arg9[%c0_32, %c0_33] : memref<72x512xf32, #tpu.memory_space<vmem>>, vector<36x512xf32>
    %cst = arith.constant dense<0.000000e+00> : vector<8x512xf32>
    %38 = tpu.matmul %36, %37, %cst {dimension_numbers = #tpu.dot_dimension_numbers<[1], [0], [0], [1], [0, 0, 1, 1], [], []>} : vector<8x36xf32>, vector<36x512xf32>, vector<8x512xf32> -> vector<8x512xf32>
    %39 = arith.addf %38, %2 : vector<8x512xf32>
    %cst_34 = arith.constant 0.000000e+00 : f32
    %40 = vector.broadcast %cst_34 : f32 to vector<8x512xf32>
    %41 = arith.maximumf %39, %40 : vector<8x512xf32>
    %c0_35 = arith.constant 0 : index
    %c0_36 = arith.constant 0 : index
    %42 = vector.load %arg7[%c0_35, %c0_36] : memref<8x1xf32, #tpu.memory_space<vmem>>, vector<8x1xf32>
    %c17_i32_37 = arith.constant 17 : i32
    %43 = tpu.dynamic_rotate %41 by %c17_i32_37 dim 1 : vector<8x512xf32>, i32 -> vector<8x512xf32>
    %c0_38 = arith.constant 0 : index
    %c0_39 = arith.constant 0 : index
    %44 = vector.load %arg3[%c0_38, %c0_39] : memref<72x512xf32, #tpu.memory_space<vmem>>, vector<8x512xf32>
    %45 = arith.mulf %43, %44 : vector<8x512xf32>
    %c0_40 = arith.constant 0 : index
    %c0_41 = arith.constant 0 : index
    %46 = vector.load %arg9[%c0_40, %c0_41] : memref<72x512xf32, #tpu.memory_space<vmem>>, vector<8x512xf32>
    tpu.vector_store %arg9[%c0_40, %c0_41], %45 {strides = array<i32>} : memref<72x512xf32, #tpu.memory_space<vmem>>, vector<8x512xf32>,
    %c16_i32_42 = arith.constant 16 : i32
    %47 = tpu.dynamic_rotate %41 by %c16_i32_42 dim 1 : vector<8x512xf32>, i32 -> vector<8x512xf32>
    %c8_43 = arith.constant 8 : index
    %c0_44 = arith.constant 0 : index
    %48 = vector.load %arg3[%c8_43, %c0_44] : memref<72x512xf32, #tpu.memory_space<vmem>>, vector<8x512xf32>
    %49 = arith.mulf %47, %48 : vector<8x512xf32>
    %c8_45 = arith.constant 8 : index
    %c0_46 = arith.constant 0 : index
    %50 = vector.load %arg9[%c8_45, %c0_46] : memref<72x512xf32, #tpu.memory_space<vmem>>, vector<8x512xf32>
    tpu.vector_store %arg9[%c8_45, %c0_46], %49 {strides = array<i32>} : memref<72x512xf32, #tpu.memory_space<vmem>>, vector<8x512xf32>,
    %c15_i32_47 = arith.constant 15 : i32
    %51 = tpu.dynamic_rotate %41 by %c15_i32_47 dim 1 : vector<8x512xf32>, i32 -> vector<8x512xf32>
    %c16_48 = arith.constant 16 : index
    %c0_49 = arith.constant 0 : index
    %52 = vector.load %arg3[%c16_48, %c0_49] : memref<72x512xf32, #tpu.memory_space<vmem>>, vector<8x512xf32>
    %53 = arith.mulf %51, %52 : vector<8x512xf32>
    %c16_50 = arith.constant 16 : index
    %c0_51 = arith.constant 0 : index
    %54 = vector.load %arg9[%c16_50, %c0_51] : memref<72x512xf32, #tpu.memory_space<vmem>>, vector<8x512xf32>
    tpu.vector_store %arg9[%c16_50, %c0_51], %53 {strides = array<i32>} : memref<72x512xf32, #tpu.memory_space<vmem>>, vector<8x512xf32>,
    %c1_i32_52 = arith.constant 1 : i32
    %55 = tpu.dynamic_rotate %41 by %c1_i32_52 dim 1 : vector<8x512xf32>, i32 -> vector<8x512xf32>
    %c24_53 = arith.constant 24 : index
    %c0_54 = arith.constant 0 : index
    %56 = vector.load %arg3[%c24_53, %c0_54] : memref<72x512xf32, #tpu.memory_space<vmem>>, vector<8x512xf32>
    %57 = arith.mulf %55, %56 : vector<8x512xf32>
    %c24_55 = arith.constant 24 : index
    %c0_56 = arith.constant 0 : index
    %58 = vector.load %arg9[%c24_55, %c0_56] : memref<72x512xf32, #tpu.memory_space<vmem>>, vector<8x512xf32>
    tpu.vector_store %arg9[%c24_55, %c0_56], %57 {strides = array<i32>} : memref<72x512xf32, #tpu.memory_space<vmem>>, vector<8x512xf32>,
    %c32_57 = arith.constant 32 : index
    %c0_58 = arith.constant 0 : index
    %59 = vector.load %arg9[%c32_57, %c0_58] : memref<72x512xf32, #tpu.memory_space<vmem>>, vector<8x512xf32>
    tpu.vector_store %arg9[%c32_57, %c0_58], %41 {strides = array<i32>} : memref<72x512xf32, #tpu.memory_space<vmem>>, vector<8x512xf32>,
    %c511_i32_59 = arith.constant 511 : i32
    %60 = tpu.dynamic_rotate %41 by %c511_i32_59 dim 1 : vector<8x512xf32>, i32 -> vector<8x512xf32>
    %c40 = arith.constant 40 : index
    %c0_60 = arith.constant 0 : index
    %61 = vector.load %arg3[%c40, %c0_60] : memref<72x512xf32, #tpu.memory_space<vmem>>, vector<8x512xf32>
    %62 = arith.mulf %60, %61 : vector<8x512xf32>
    %c40_61 = arith.constant 40 : index
    %c0_62 = arith.constant 0 : index
    %63 = vector.load %arg9[%c40_61, %c0_62] : memref<72x512xf32, #tpu.memory_space<vmem>>, vector<8x512xf32>
    tpu.vector_store %arg9[%c40_61, %c0_62], %62 {strides = array<i32>} : memref<72x512xf32, #tpu.memory_space<vmem>>, vector<8x512xf32>,
    %c497_i32_63 = arith.constant 497 : i32
    %64 = tpu.dynamic_rotate %41 by %c497_i32_63 dim 1 : vector<8x512xf32>, i32 -> vector<8x512xf32>
    %c48 = arith.constant 48 : index
    %c0_64 = arith.constant 0 : index
    %65 = vector.load %arg3[%c48, %c0_64] : memref<72x512xf32, #tpu.memory_space<vmem>>, vector<8x512xf32>
    %66 = arith.mulf %64, %65 : vector<8x512xf32>
    %c48_65 = arith.constant 48 : index
    %c0_66 = arith.constant 0 : index
    %67 = vector.load %arg9[%c48_65, %c0_66] : memref<72x512xf32, #tpu.memory_space<vmem>>, vector<8x512xf32>
    tpu.vector_store %arg9[%c48_65, %c0_66], %66 {strides = array<i32>} : memref<72x512xf32, #tpu.memory_space<vmem>>, vector<8x512xf32>,
    %c496_i32_67 = arith.constant 496 : i32
    %68 = tpu.dynamic_rotate %41 by %c496_i32_67 dim 1 : vector<8x512xf32>, i32 -> vector<8x512xf32>
    %c56 = arith.constant 56 : index
    %c0_68 = arith.constant 0 : index
    %69 = vector.load %arg3[%c56, %c0_68] : memref<72x512xf32, #tpu.memory_space<vmem>>, vector<8x512xf32>
    %70 = arith.mulf %68, %69 : vector<8x512xf32>
    %c56_69 = arith.constant 56 : index
    %c0_70 = arith.constant 0 : index
    %71 = vector.load %arg9[%c56_69, %c0_70] : memref<72x512xf32, #tpu.memory_space<vmem>>, vector<8x512xf32>
    tpu.vector_store %arg9[%c56_69, %c0_70], %70 {strides = array<i32>} : memref<72x512xf32, #tpu.memory_space<vmem>>, vector<8x512xf32>,
    %c495_i32_71 = arith.constant 495 : i32
    %72 = tpu.dynamic_rotate %41 by %c495_i32_71 dim 1 : vector<8x512xf32>, i32 -> vector<8x512xf32>
    %c64 = arith.constant 64 : index
    %c0_72 = arith.constant 0 : index
    %73 = vector.load %arg3[%c64, %c0_72] : memref<72x512xf32, #tpu.memory_space<vmem>>, vector<8x512xf32>
    %74 = arith.mulf %72, %73 : vector<8x512xf32>
    %c64_73 = arith.constant 64 : index
    %c0_74 = arith.constant 0 : index
    %75 = vector.load %arg9[%c64_73, %c0_74] : memref<72x512xf32, #tpu.memory_space<vmem>>, vector<8x512xf32>
    tpu.vector_store %arg9[%c64_73, %c0_74], %74 {strides = array<i32>} : memref<72x512xf32, #tpu.memory_space<vmem>>, vector<8x512xf32>,
    %c0_75 = arith.constant 0 : index
    %c0_76 = arith.constant 0 : index
    %76 = vector.load %arg6[%c0_75, %c0_76] : memref<8x72xf32, #tpu.memory_space<vmem>>, vector<8x72xf32>
    %c0_77 = arith.constant 0 : index
    %c0_78 = arith.constant 0 : index
    %77 = vector.load %arg9[%c0_77, %c0_78] : memref<72x512xf32, #tpu.memory_space<vmem>>, vector<72x512xf32>
    %cst_79 = arith.constant dense<0.000000e+00> : vector<8x512xf32>
    %78 = tpu.matmul %76, %77, %cst_79 {dimension_numbers = #tpu.dot_dimension_numbers<[1], [0], [0], [1], [0, 0, 1, 1], [], []>} : vector<8x72xf32>, vector<72x512xf32>, vector<8x512xf32> -> vector<8x512xf32>
    %79 = vector.broadcast %42 : vector<8x1xf32> to vector<8x512xf32>
    %80 = arith.addf %78, %79 : vector<8x512xf32>
    %cst_80 = arith.constant 0.000000e+00 : f32
    %81 = vector.broadcast %cst_80 : f32 to vector<8x512xf32>
    %82 = arith.maximumf %80, %81 : vector<8x512xf32>
    %83 = tpu.concatenate %1, %41, %82 in 0 : vector<4x512xf32>, vector<8x512xf32>, vector<8x512xf32> -> vector<20x512xf32>
    %c0_81 = arith.constant 0 : index
    %c0_82 = arith.constant 0 : index
    %c0_83 = arith.constant 0 : index
    %84 = vector.load %arg8[%c0_81, %c0_82, %c0_83] : memref<1x20x512xf32, #tpu.memory_space<vmem>>, vector<1x20x512xf32>
    %85 = vector.shape_cast %84 : vector<1x20x512xf32> to vector<20x512xf32>
    %86 = vector.shape_cast %83 : vector<20x512xf32> to vector<1x20x512xf32>
    tpu.vector_store %arg8[%c0_81, %c0_82, %c0_83], %86 {strides = array<i32>} : memref<1x20x512xf32, #tpu.memory_space<vmem>>, vector<1x20x512xf32>,
    return
  }
  func.func @transform_0(%arg0: i32) -> (i32, i32, i32) {
    %c0_i32 = arith.constant 0 : i32
    %c0_i32_0 = arith.constant 0 : i32
    %c0_i32_1 = arith.constant 0 : i32
    return %arg0, %c0_i32, %c0_i32_0 : i32, i32, i32
  }
  func.func @transform_1(%arg0: i32) -> (i32, i32) {
    %c0_i32 = arith.constant 0 : i32
    %c0_i32_0 = arith.constant 0 : i32
    %c0_i32_1 = arith.constant 0 : i32
    return %c0_i32, %c0_i32_0 : i32, i32
  }
  func.func @transform_2(%arg0: i32) -> (i32, i32) {
    %c0_i32 = arith.constant 0 : i32
    %c0_i32_0 = arith.constant 0 : i32
    %c0_i32_1 = arith.constant 0 : i32
    return %c0_i32, %c0_i32_0 : i32, i32
  }
  func.func @transform_3(%arg0: i32) -> (i32, i32) {
    %c0_i32 = arith.constant 0 : i32
    %c0_i32_0 = arith.constant 0 : i32
    %c0_i32_1 = arith.constant 0 : i32
    return %c0_i32, %c0_i32_0 : i32, i32
  }
  func.func @transform_4(%arg0: i32) -> (i32, i32) {
    %c0_i32 = arith.constant 0 : i32
    %c0_i32_0 = arith.constant 0 : i32
    %c0_i32_1 = arith.constant 0 : i32
    return %c0_i32, %c0_i32_0 : i32, i32
  }
  func.func @transform_5(%arg0: i32) -> (i32, i32) {
    %c0_i32 = arith.constant 0 : i32
    %c0_i32_0 = arith.constant 0 : i32
    %c0_i32_1 = arith.constant 0 : i32
    return %c0_i32, %c0_i32_0 : i32, i32
  }
  func.func @transform_6(%arg0: i32) -> (i32, i32) {
    %c0_i32 = arith.constant 0 : i32
    %c0_i32_0 = arith.constant 0 : i32
    %c0_i32_1 = arith.constant 0 : i32
    return %c0_i32, %c0_i32_0 : i32, i32
  }
  func.func @transform_7(%arg0: i32) -> (i32, i32, i32) {
    %c0_i32 = arith.constant 0 : i32
    %c0_i32_0 = arith.constant 0 : i32
    %c0_i32_1 = arith.constant 0 : i32
    return %arg0, %c0_i32, %c0_i32_0 : i32, i32, i32
  }
}

</mosaic_0001>

<llo_original>
// kernel: tpu_custom_call.1
$region0: #{tpu_custom_call.1}
  #allocation0 [shape = 'u32[]', space=smem, size = 0x4, offset = 0x4, fixed_abs, tag = 'smem constant byte address 0x4 - core index']
  #allocation1 [shape = 'u32[144,128]{1,0:T(1,128)}', space=vmem, size = 0x12000, scoped, tag = 'internal scratch']
  #allocation2 [shape = 'f32[72,512]{1,0:T(8,128)}', space=vmem, size = 0x24000, scoped, tag = 'scratch operand']
  %s0 = inlined_call_operand.hbm [shape: f32[1,4,512], index: 0, kind: input, shape index: {}]
  %s1 = inlined_call_operand.hbm [shape: f32[36,512], index: 1, kind: input, shape index: {}]
  %s2 = inlined_call_operand.hbm [shape: f32[72,512], index: 2, kind: input, shape index: {}]
  %s3 = inlined_call_operand.vmem [shape: f32[8,36], index: 3, kind: input, shape index: {}]
  %s4 = inlined_call_operand.hbm [shape: f32[8,512], index: 4, kind: input, shape index: {}]
  %s5 = inlined_call_operand.vmem [shape: f32[8,72], index: 5, kind: input, shape index: {}]
  %s6 = inlined_call_operand.vmem [shape: f32[8,1], index: 6, kind: input, shape index: {}]
  %s7 = inlined_call_operand.vmem [shape: f32[1,20,512], index: 7, kind: output, shape index: {}]
  %s8 = sld [smem:[#allocation0]]
  $region54: #{tpu_custom_call.1} parent=0
    _
  %s10 = ssub.s32 1, %s8
  %s11 = scalar_select 0, %s10, %s8
  $region1: #{tpu_custom_call.1} parent=0
    #allocation3 [shape = 'u8[8192]{0}', space=vmem, size = 0x2000, scoped, tag = 'input window, operand 0, single buffered']
    #allocation4 [shape = 's32[1]{0}', space=sflag, size = 0x4, scoped, tag = 'scoped memory for tpu_custom_call.1']
    #allocation5 [shape = 'u8[81920]{0}', space=vmem, size = 0x14000, scoped, tag = 'input window, operand 1, single buffered']
    #allocation6 [shape = 's32[1]{0}', space=sflag, size = 0x4, scoped, tag = 'scoped memory for tpu_custom_call.1']
    #allocation7 [shape = 'u8[147456]{0}', space=vmem, size = 0x24000, scoped, tag = 'input window, operand 2, single buffered']
    #allocation8 [shape = 'u8[16384]{0}', space=vmem, size = 0x4000, scoped, tag = 'input window, operand 4, single buffered']
    #allocation9 [shape = 's32[1]{0}', space=sflag, size = 0x4, scoped, tag = 'scoped memory for tpu_custom_call.1']
    %12 = vsyncpa [#allocation4], 0
    %13 = vsyncpa [#allocation6], 0
    %14 = vsyncpa [#allocation9], 0
    // Predicated region
    $region2: #{tpu_custom_call.1} parent=1 // pred_check
      _
    $region3: #{tpu_custom_call.1} parent=1 // pred_check_branch
      %16 = sbr.rel (0) target = $region5
    $region4: #{tpu_custom_call.1} parent=1 // pred_region
      %s18 = ssub.s32 256, 256
      %19 = vsyncadd [#allocation4], %s18
      %s21 = sshll.u32 [#allocation3], 4
      %s22 = int_to_ptr.vmem [resolvable:$true] %s21
      %24 = dma.hbm_to_vmem [thread:$0]  %s0, 256, %s22, [#allocation4]
    $region5: #{tpu_custom_call.1} parent=1 // pred_fallthru
      _
    // Predicated region
    $region6: #{tpu_custom_call.1} parent=1 // pred_check
      _
    $region7: #{tpu_custom_call.1} parent=1 // pred_check_branch
      %26 = sbr.rel (0) target = $region9
    $region8: #{tpu_custom_call.1} parent=1 // pred_region
      %s28 = ssub.s32 2560, 2560
      %29 = vsyncadd [#allocation6], %s28
      %s30 = sshll.u32 [#allocation5], 4
      %s31 = int_to_ptr.vmem [resolvable:$true] %s30
      %36 = dma.hbm_to_vmem [thread:$0]  %s1, 2560, %s31, [#allocation6], 512, 512, 32
    $region9: #{tpu_custom_call.1} parent=1 // pred_fallthru
      _
    // Predicated region
    $region10: #{tpu_custom_call.1} parent=1 // pred_check
      _
    $region11: #{tpu_custom_call.1} parent=1 // pred_check_branch
      %38 = sbr.rel (0) target = $region13
    $region12: #{tpu_custom_call.1} parent=1 // pred_region
      %s40 = ssub.s32 4608, 4608
      %41 = vsyncadd [#allocation6], %s40
      %s42 = sshll.u32 [#allocation7], 4
      %s43 = int_to_ptr.vmem [resolvable:$true] %s42
      %48 = dma.hbm_to_vmem [thread:$0]  %s2, 4608, %s43, [#allocation6], 512, 512, 32
    $region13: #{tpu_custom_call.1} parent=1 // pred_fallthru
      _
    // Predicated region
    $region14: #{tpu_custom_call.1} parent=1 // pred_check
      _
    $region15: #{tpu_custom_call.1} parent=1 // pred_check_branch
      %50 = sbr.rel (0) target = $region17
    $region16: #{tpu_custom_call.1} parent=1 // pred_region
      _
    $region17: #{tpu_custom_call.1} parent=1 // pred_fallthru
      _
    // Predicated region
    $region18: #{tpu_custom_call.1} parent=1 // pred_check
      _
    $region19: #{tpu_custom_call.1} parent=1 // pred_check_branch
      %52 = sbr.rel (0) target = $region21
    $region20: #{tpu_custom_call.1} parent=1 // pred_region
      %s54 = ssub.s32 512, 512
      %55 = vsyncadd [#allocation9], %s54
      %s57 = sshll.u32 [#allocation8], 4
      %s58 = int_to_ptr.vmem [resolvable:$true] %s57
      %60 = dma.hbm_to_vmem [thread:$0]  %s4, 512, %s58, [#allocation9]
    $region21: #{tpu_custom_call.1} parent=1 // pred_fallthru
      _
    // Predicated region
    $region22: #{tpu_custom_call.1} parent=1 // pred_check
      _
    $region23: #{tpu_custom_call.1} parent=1 // pred_check_branch
      %62 = sbr.rel (0) target = $region25
    $region24: #{tpu_custom_call.1} parent=1 // pred_region
      _
    $region25: #{tpu_custom_call.1} parent=1 // pred_fallthru
      _
    // Predicated region
    $region26: #{tpu_custom_call.1} parent=1 // pred_check
      _
    $region27: #{tpu_custom_call.1} parent=1 // pred_check_branch
      %64 = sbr.rel (0) target = $region29
    $region28: #{tpu_custom_call.1} parent=1 // pred_region
      _
    $region29: #{tpu_custom_call.1} parent=1 // pred_fallthru
      _
    // Predicated region
    $region30: #{tpu_custom_call.1} parent=1 // pred_check
      _
    $region31: #{tpu_custom_call.1} parent=1 // pred_check_branch
      %66 = sbr.rel (0) target = $region33
    $region32: #{tpu_custom_call.1} parent=1 // pred_region
      %67 = dma.done [#allocation4], 256
    $region33: #{tpu_custom_call.1} parent=1 // pred_fallthru
      _
    // Predicated region
    $region34: #{tpu_custom_call.1} parent=1 // pred_check
      _
    $region35: #{tpu_custom_call.1} parent=1 // pred_check_branch
      %69 = sbr.rel (0) target = $region37
    $region36: #{tpu_custom_call.1} parent=1 // pred_region
      %70 = dma.done [#allocation6], 2560
    $region37: #{tpu_custom_call.1} parent=1 // pred_fallthru
      _
    // Predicated region
    $region38: #{tpu_custom_call.1} parent=1 // pred_check
      _
    $region39: #{tpu_custom_call.1} parent=1 // pred_check_branch
      %72 = sbr.rel (0) target = $region41
    $region40: #{tpu_custom_call.1} parent=1 // pred_region
      %73 = dma.done [#allocation6], 4608
    $region41: #{tpu_custom_call.1} parent=1 // pred_fallthru
      _
    // Predicated region
    $region42: #{tpu_custom_call.1} parent=1 // pred_check
      _
    $region43: #{tpu_custom_call.1} parent=1 // pred_check_branch
      %75 = sbr.rel (0) target = $region45
    $region44: #{tpu_custom_call.1} parent=1 // pred_region
      %76 = dma.done [#allocation9], 512
    $region45: #{tpu_custom_call.1} parent=1 // pred_fallthru
      _
    %v77 = vld [vmem:[#allocation3] sm:$0xff]
    %v78 = vld [vmem:[#allocation3 + $0x8] sm:$0xff]
    %v79 = vld [vmem:[#allocation8] sm:$0xff]
    %v80 = vld [vmem:[#allocation8 + $0x8] sm:$0xff]
    %v81 = vld [vmem:[#allocation8 + $0x10] sm:$0xff]
    %v82 = vld [vmem:[#allocation8 + $0x18] sm:$0xff]
    %v85 = vcombine.high %v77, %v77
    %v86 = vcombine.high %v78, %v78
    %89 = vrot.lane.b32.xlu0 %v77, 17
    %v90 = vpop.permute.xlu0 %89
    %91 = vrot.lane.b32.xlu0 %v85, 17
    %v92 = vpop.permute.xlu0 %91
    %93 = vrot.lane.b32.xlu0 %v78, 17
    %v94 = vpop.permute.xlu0 %93
    %95 = vrot.lane.b32.xlu0 %v86, 17
    %v96 = vpop.permute.xlu0 %95
    %v97 = vlaneseq
    %v98 = vand.u32 %v97, 127
    %vm99 = vcmp.lt.s32.totalorder %v98, 17
    %v100 = vsel %vm99, %v94, %v96
    %v101 = vsel %vm99, %v92, %v94
    %v102 = vsel %vm99, %v90, %v92
    %v103 = vsel %vm99, %v96, %v90
    %v104 = vld [vmem:[#allocation5] sm:$0xf]
    %v105 = vld [vmem:[#allocation5 + $0x8] sm:$0xf]
    %v106 = vld [vmem:[#allocation5 + $0x10] sm:$0xf]
    %v107 = vld [vmem:[#allocation5 + $0x18] sm:$0xf]
    %v108 = vmul.f32 %v103, %v104
    %v109 = vmul.f32 %v102, %v105
    %v110 = vmul.f32 %v101, %v106
    %v111 = vmul.f32 %v100, %v107
    %112 = vst [vmem:[#allocation2] sm:$0xf] %v108
    %113 = vst [vmem:[#allocation2 + $0x8] sm:$0xf] %v109
    %114 = vst [vmem:[#allocation2 + $0x10] sm:$0xf] %v110
    %115 = vst [vmem:[#allocation2 + $0x18] sm:$0xf] %v111
    %116 = vrot.lane.b32.xlu0 %v77, 16
    %v117 = vpop.permute.xlu0 %116
    %118 = vrot.lane.b32.xlu0 %v85, 16
    %v119 = vpop.permute.xlu0 %118
    %120 = vrot.lane.b32.xlu0 %v78, 16
    %v121 = vpop.permute.xlu0 %120
    %122 = vrot.lane.b32.xlu0 %v86, 16
    %v123 = vpop.permute.xlu0 %122
    %vm124 = vcmp.lt.s32.totalorder %v98, 16
    %v125 = vsel %vm124, %v121, %v123
    %v126 = vsel %vm124, %v119, %v121
    %v127 = vsel %vm124, %v117, %v119
    %v128 = vsel %vm124, %v123, %v117
    %v129 = vld [vmem:[#allocation5] sm:$0xf0]
    %v130 = vld [vmem:[#allocation5 + $0x8] sm:$0xf0]
    %v131 = vld [vmem:[#allocation5 + $0x10] sm:$0xf0]
    %v132 = vld [vmem:[#allocation5 + $0x18] sm:$0xf0]
    %v137 = vrot.slane %v129, 4
    %v138 = vrot.slane %v130, 4
    %v139 = vrot.slane %v131, 4
    %v140 = vrot.slane %v132, 4
    %v145 = vmul.f32 %v128, %v137
    %v146 = vmul.f32 %v127, %v138
    %v147 = vmul.f32 %v126, %v139
    %v148 = vmul.f32 %v125, %v140
    %v153 = vrot.slane %v145, 4
    %v154 = vrot.slane %v146, 4
    %v155 = vrot.slane %v147, 4
    %v156 = vrot.slane %v148, 4
    %161 = vst [vmem:[#allocation2] sm:$0xf0] %v153
    %162 = vst [vmem:[#allocation2 + $0x8] sm:$0xf0] %v154
    %163 = vst [vmem:[#allocation2 + $0x10] sm:$0xf0] %v155
    %164 = vst [vmem:[#allocation2 + $0x18] sm:$0xf0] %v156
    %165 = vrot.lane.b32.xlu0 %v77, 15
    %v166 = vpop.permute.xlu0 %165
    %167 = vrot.lane.b32.xlu0 %v85, 15
    %v168 = vpop.permute.xlu0 %167
    %169 = vrot.lane.b32.xlu0 %v78, 15
    %v170 = vpop.permute.xlu0 %169
    %171 = vrot.lane.b32.xlu0 %v86, 15
    %v172 = vpop.permute.xlu0 %171
    %vm173 = vcmp.lt.s32.totalorder %v98, 15
    %v174 = vsel %vm173, %v170, %v172
    %v175 = vsel %vm173, %v168, %v170
    %v176 = vsel %vm173, %v166, %v168
    %v177 = vsel %vm173, %v172, %v166
    %v178 = vld [vmem:[#allocation5 + $0x20] sm:$0xf]
    %v179 = vld [vmem:[#allocation5 + $0x28] sm:$0xf]
    %v180 = vld [vmem:[#allocation5 + $0x30] sm:$0xf]
    %v181 = vld [vmem:[#allocation5 + $0x38] sm:$0xf]
    %v182 = vmul.f32 %v177, %v178
    %v183 = vmul.f32 %v176, %v179
    %v184 = vmul.f32 %v175, %v180
    %v185 = vmul.f32 %v174, %v181
    %186 = vst [vmem:[#allocation2 + $0x20] sm:$0xf] %v182
    %187 = vst [vmem:[#allocation2 + $0x28] sm:$0xf] %v183
    %188 = vst [vmem:[#allocation2 + $0x30] sm:$0xf] %v184
    %189 = vst [vmem:[#allocation2 + $0x38] sm:$0xf] %v185
    %190 = vrot.lane.b32.xlu0 %v77, 1
    %v191 = vpop.permute.xlu0 %190
    %192 = vrot.lane.b32.xlu0 %v85, 1
    %v193 = vpop.permute.xlu0 %192
    %194 = vrot.lane.b32.xlu0 %v78, 1
    %v195 = vpop.permute.xlu0 %194
    %196 = vrot.lane.b32.xlu0 %v86, 1
    %v197 = vpop.permute.xlu0 %196
    %vm198 = vcmp.lt.s32.totalorder %v98, 1
    %v199 = vsel %vm198, %v195, %v197
    %v200 = vsel %vm198, %v193, %v195
    %v201 = vsel %vm198, %v191, %v193
    %v202 = vsel %vm198, %v197, %v191
    %v203 = vld [vmem:[#allocation5 + $0x20] sm:$0xf0]
    %v204 = vld [vmem:[#allocation5 + $0x28] sm:$0xf0]
    %v205 = vld [vmem:[#allocation5 + $0x30] sm:$0xf0]
    %v206 = vld [vmem:[#allocation5 + $0x38] sm:$0xf0]
    %v211 = vrot.slane %v203, 4
    %v212 = vrot.slane %v204, 4
    %v213 = vrot.slane %v205, 4
    %v214 = vrot.slane %v206, 4
    %v219 = vmul.f32 %v202, %v211
    %v220 = vmul.f32 %v201, %v212
    %v221 = vmul.f32 %v200, %v213
    %v222 = vmul.f32 %v199, %v214
    %v227 = vrot.slane %v219, 4
    %v228 = vrot.slane %v220, 4
    %v229 = vrot.slane %v221, 4
    %v230 = vrot.slane %v222, 4
    %235 = vst [vmem:[#allocation2 + $0x20] sm:$0xf0] %v227
    %236 = vst [vmem:[#allocation2 + $0x28] sm:$0xf0] %v228
    %237 = vst [vmem:[#allocation2 + $0x30] sm:$0xf0] %v229
    %238 = vst [vmem:[#allocation2 + $0x38] sm:$0xf0] %v230
    %239 = vst [vmem:[#allocation2 + $0x40] sm:$0xf] %v77
    %240 = vst [vmem:[#allocation2 + $0x48] sm:$0xf] %v85
    %241 = vst [vmem:[#allocation2 + $0x50] sm:$0xf] %v78
    %242 = vst [vmem:[#allocation2 + $0x58] sm:$0xf] %v86
    %243 = vrot.lane.b32.xlu0 %v77, 127
    %v244 = vpop.permute.xlu0 %243
    %245 = vrot.lane.b32.xlu0 %v85, 127
    %v246 = vpop.permute.xlu0 %245
    %247 = vrot.lane.b32.xlu0 %v78, 127
    %v248 = vpop.permute.xlu0 %247
    %249 = vrot.lane.b32.xlu0 %v86, 127
    %v250 = vpop.permute.xlu0 %249
    %vm251 = vcmp.lt.s32.totalorder %v98, 127
    %v252 = vsel %vm251, %v248, %v250
    %v253 = vsel %vm251, %v246, %v248
    %v254 = vsel %vm251, %v244, %v246
    %v255 = vsel %vm251, %v250, %v244
    %v256 = vld [vmem:[#allocation5 + $0x40] sm:$0xf0]
    %v257 = vld [vmem:[#allocation5 + $0x48] sm:$0xf0]
    %v258 = vld [vmem:[#allocation5 + $0x50] sm:$0xf0]
    %v259 = vld [vmem:[#allocation5 + $0x58] sm:$0xf0]
    %v264 = vrot.slane %v256, 4
    %v265 = vrot.slane %v257, 4
    %v266 = vrot.slane %v258, 4
    %v267 = vrot.slane %v259, 4
    %v272 = vmul.f32 %v254, %v264
    %v273 = vmul.f32 %v253, %v265
    %v274 = vmul.f32 %v252, %v266
    %v275 = vmul.f32 %v255, %v267
    %v280 = vrot.slane %v272, 4
    %v281 = vrot.slane %v273, 4
    %v282 = vrot.slane %v274, 4
    %v283 = vrot.slane %v275, 4
    %288 = vst [vmem:[#allocation2 + $0x40] sm:$0xf0] %v280
    %289 = vst [vmem:[#allocation2 + $0x48] sm:$0xf0] %v281
    %290 = vst [vmem:[#allocation2 + $0x50] sm:$0xf0] %v282
    %291 = vst [vmem:[#allocation2 + $0x58] sm:$0xf0] %v283
    %292 = vrot.lane.b32.xlu0 %v77, 113
    %v293 = vpop.permute.xlu0 %292
    %294 = vrot.lane.b32.xlu0 %v85, 113
    %v295 = vpop.permute.xlu0 %294
    %296 = vrot.lane.b32.xlu0 %v78, 113
    %v297 = vpop.permute.xlu0 %296
    %298 = vrot.lane.b32.xlu0 %v86, 113
    %v299 = vpop.permute.xlu0 %298
    %vm300 = vcmp.lt.s32.totalorder %v98, 113
    %v301 = vsel %vm300, %v297, %v299
    %v302 = vsel %vm300, %v295, %v297
    %v303 = vsel %vm300, %v293, %v295
    %v304 = vsel %vm300, %v299, %v293
    %v305 = vld [vmem:[#allocation5 + $0x60] sm:$0xf]
    %v306 = vld [vmem:[#allocation5 + $0x68] sm:$0xf]
    %v307 = vld [vmem:[#allocation5 + $0x70] sm:$0xf]
    %v308 = vld [vmem:[#allocation5 + $0x78] sm:$0xf]
    %v309 = vmul.f32 %v303, %v305
    %v310 = vmul.f32 %v302, %v306
    %v311 = vmul.f32 %v301, %v307
    %v312 = vmul.f32 %v304, %v308
    %313 = vst [vmem:[#allocation2 + $0x60] sm:$0xf] %v309
    %314 = vst [vmem:[#allocation2 + $0x68] sm:$0xf] %v310
    %315 = vst [vmem:[#allocation2 + $0x70] sm:$0xf] %v311
    %316 = vst [vmem:[#allocation2 + $0x78] sm:$0xf] %v312
    %317 = vrot.lane.b32.xlu0 %v77, 112
    %v318 = vpop.permute.xlu0 %317
    %319 = vrot.lane.b32.xlu0 %v85, 112
    %v320 = vpop.permute.xlu0 %319
    %321 = vrot.lane.b32.xlu0 %v78, 112
    %v322 = vpop.permute.xlu0 %321
    %323 = vrot.lane.b32.xlu0 %v86, 112
    %v324 = vpop.permute.xlu0 %323
    %vm325 = vcmp.lt.s32.totalorder %v98, 112
    %v326 = vsel %vm325, %v322, %v324
    %v327 = vsel %vm325, %v320, %v322
    %v328 = vsel %vm325, %v318, %v320
    %v329 = vsel %vm325, %v324, %v318
    %v330 = vld [vmem:[#allocation5 + $0x60] sm:$0xf0]
    %v331 = vld [vmem:[#allocation5 + $0x68] sm:$0xf0]
    %v332 = vld [vmem:[#allocation5 + $0x70] sm:$0xf0]
    %v333 = vld [vmem:[#allocation5 + $0x78] sm:$0xf0]
    %v338 = vrot.slane %v330, 4
    %v339 = vrot.slane %v331, 4
    %v340 = vrot.slane %v332, 4
    %v341 = vrot.slane %v333, 4
    %v346 = vmul.f32 %v328, %v338
    %v347 = vmul.f32 %v327, %v339
    %v348 = vmul.f32 %v326, %v340
    %v349 = vmul.f32 %v329, %v341
    %v354 = vrot.slane %v346, 4
    %v355 = vrot.slane %v347, 4
    %v356 = vrot.slane %v348, 4
    %v357 = vrot.slane %v349, 4
    %362 = vst [vmem:[#allocation2 + $0x60] sm:$0xf0] %v354
    %363 = vst [vmem:[#allocation2 + $0x68] sm:$0xf0] %v355
    %364 = vst [vmem:[#allocation2 + $0x70] sm:$0xf0] %v356
    %365 = vst [vmem:[#allocation2 + $0x78] sm:$0xf0] %v357
    %366 = vrot.lane.b32.xlu0 %v77, 111
    %v367 = vpop.permute.xlu0 %366
    %368 = vrot.lane.b32.xlu0 %v85, 111
    %v369 = vpop.permute.xlu0 %368
    %370 = vrot.lane.b32.xlu0 %v78, 111
    %v371 = vpop.permute.xlu0 %370
    %372 = vrot.lane.b32.xlu0 %v86, 111
    %v373 = vpop.permute.xlu0 %372
    %vm374 = vcmp.lt.s32.totalorder %v98, 111
    %v375 = vsel %vm374, %v371, %v373
    %v376 = vsel %vm374, %v369, %v371
    %v377 = vsel %vm374, %v367, %v369
    %v378 = vsel %vm374, %v373, %v367
    %v379 = vld [vmem:[#allocation5 + $0x80] sm:$0xf]
    %v380 = vld [vmem:[#allocation5 + $0x88] sm:$0xf]
    %v381 = vld [vmem:[#allocation5 + $0x90] sm:$0xf]
    %v382 = vld [vmem:[#allocation5 + $0x98] sm:$0xf]
    %v383 = vmul.f32 %v377, %v379
    %v384 = vmul.f32 %v376, %v380
    %v385 = vmul.f32 %v375, %v381
    %v386 = vmul.f32 %v378, %v382
    %387 = vst [vmem:[#allocation2 + $0x80] sm:$0xf] %v383
    %388 = vst [vmem:[#allocation2 + $0x88] sm:$0xf] %v384
    %389 = vst [vmem:[#allocation2 + $0x90] sm:$0xf] %v385
    %390 = vst [vmem:[#allocation2 + $0x98] sm:$0xf] %v386
    %v391 = vld [vmem:[%s3] sm:$0xff]
    %v392 = vld [vmem:[#allocation2] sm:$0xff]
    %v393 = vld [vmem:[#allocation2 + $0x8] sm:$0xff]
    %v394 = vld [vmem:[#allocation2 + $0x10] sm:$0xff]
    %v395 = vld [vmem:[#allocation2 + $0x18] sm:$0xff]
    %v396 = vld [vmem:[#allocation2 + $0x20] sm:$0xff]
    %v397 = vld [vmem:[#allocation2 + $0x28] sm:$0xff]
    %v398 = vld [vmem:[#allocation2 + $0x30] sm:$0xff]
    %v399 = vld [vmem:[#allocation2 + $0x38] sm:$0xff]
    %v400 = vld [vmem:[#allocation2 + $0x40] sm:$0xff]
    %v401 = vld [vmem:[#allocation2 + $0x48] sm:$0xff]
    %v402 = vld [vmem:[#allocation2 + $0x50] sm:$0xff]
    %v403 = vld [vmem:[#allocation2 + $0x58] sm:$0xff]
    %v404 = vld [vmem:[#allocation2 + $0x60] sm:$0xff]
    %v405 = vld [vmem:[#allocation2 + $0x68] sm:$0xff]
    %v406 = vld [vmem:[#allocation2 + $0x70] sm:$0xff]
    %v407 = vld [vmem:[#allocation2 + $0x78] sm:$0xff]
    %v408 = vld [vmem:[#allocation2 + $0x80] sm:$0xf]
    %v409 = vld [vmem:[#allocation2 + $0x88] sm:$0xf]
    %v410 = vld [vmem:[#allocation2 + $0x90] sm:$0xf]
    %v411 = vld [vmem:[#allocation2 + $0x98] sm:$0xf]
    %vm412 = vcmask 293888
    %v414 = vsel %vm412, %v391, 0
    %vm416 = vcmask 1043456
    %v418 = vsel %vm416, %v408, 0
    %v421 = vsel %vm416, %v409, 0
    %v424 = vsel %vm416, %v410, 0
    %v427 = vsel %vm416, %v411, 0
    %429 = vmatprep.subr.mxu0 %v393
    %430 = vmatpush1.msra.mxu0 %v392
    %431 = vmatprep.subr.mxu0 %v397
    %432 = vmatpush1.msra.mxu0 %v396
    %433 = vmatprep.subr.mxu0 %v401
    %434 = vmatpush1.msra.mxu0 %v400
    %435 = vmatprep.subr.mxu0 %v405
    %436 = vmatpush1.msra.mxu0 %v404
    %437 = vmatprep.subr.mxu0 %v421
    %438 = vmatpush1.msra.mxu0 %v418
    %439 = vmatprep.subr.mxu0 0.0
    %440 = vmatpush1.msra.mxu0 0.0
    %441 = vmatprep.subr.mxu0 0.0
    %442 = vmatpush1.msra.mxu0 0.0
    %443 = vmatprep.subr.mxu0 0.0
    %444 = vmatpush1.msra.mxu0 0.0
    %445 = vmatprep.subr.mxu0 0.0
    %446 = vmatpush1.msra.mxu0 0.0
    %447 = vmatprep.subr.mxu0 0.0
    %448 = vmatpush1.msra.mxu0 0.0
    %449 = vmatprep.subr.mxu0 0.0
    %450 = vmatpush1.msra.mxu0 0.0
    %451 = vmatprep.subr.mxu0 0.0
    %452 = vmatpush1.msra.mxu0 0.0
    %453 = vmatprep.subr.mxu0 0.0
    %454 = vmatpush1.msra.mxu0 0.0
    %455 = vmatprep.subr.mxu0 0.0
    %456 = vmatpush1.msra.mxu0 0.0
    %457 = vmatprep.subr.mxu0 0.0
    %458 = vmatpush1.msra.mxu0 0.0
    %459 = vmatprep.subr.mxu0 0.0
    %460 = vmatpush1.msra.mxu0 0.0
    %461 = vmatprep.subr.mxu0 0.0
    %462 = vmatpush1.msra.mxu0 0.0
    %463 = vmatprep.subr.mxu0 0.0
    %464 = vmatpush1.msra.mxu0 0.0
    %465 = vmatprep.subr.mxu0 0.0
    %466 = vmatpush1.msra.mxu0 0.0
    %467 = vmatprep.subr.mxu0 0.0
    %468 = vmatpush1.msra.mxu0 0.0
    %469 = vmatprep.subr.mxu0 0.0
    %470 = vmatpush1.msra.mxu0 0.0
    %471 = vmatprep.subr.mxu0 0.0
    %472 = vmatpush1.msra.mxu0 0.0
    %473 = vmatprep.subr.mxu0 0.0
    %474 = vmatpush1.msra.mxu0 0.0
    %475 = vmatprep.subr.mxu0 0.0
    %476 = vmatpush1.msra.mxu0 0.0
    %477 = vmatprep.subr.mxu0 0.0
    %478 = vmatpush1.msra.mxu0 0.0
    %479 = vmatprep.subr.mxu0 0.0
    %480 = vmatpush1.msra.mxu0 0.0
    %481 = vmatprep.subr.mxu0 0.0
    %482 = vmatpush1.msra.mxu0 0.0
    %483 = vmatprep.subr.mxu0 0.0
    %484 = vmatpush1.msra.mxu0 0.0
    %485 = vmatprep.subr.mxu0 0.0
    %486 = vmatpush1.msra.mxu0 0.0
    %487 = vmatprep.subr.mxu0 0.0
    %488 = vmatpush1.msra.mxu0 0.0
    %489 = vmatprep.subr.mxu0 0.0
    %490 = vmatpush1.msra.mxu0 0.0
    %491 = vmatprep.subr.mxu0 0.0
    %492 = vmatpush1.msra.mxu0 0.0
    %493 = vmatprep.mubr.f32.mxu0 0.0
    %494 = vmatmul.mubr.f32.gmra.mrb[0].mxu0 %v414
    %v495 = vpop.f32.mrb[0].mxu0
    %v496 = vadd.f32 %v79, %v495
    %v497 = vpop.f32.mrb[0].mxu0
    %v498 = vadd.f32 %v80, %v497
    %499 = vdwg.mxu0
    %500 = vmatprep.subr.mxu0 %v395
    %501 = vmatpush1.msra.mxu0 %v394
    %502 = vmatprep.subr.mxu0 %v399
    %503 = vmatpush1.msra.mxu0 %v398
    %504 = vmatprep.subr.mxu0 %v403
    %505 = vmatpush1.msra.mxu0 %v402
    %506 = vmatprep.subr.mxu0 %v407
    %507 = vmatpush1.msra.mxu0 %v406
    %508 = vmatprep.subr.mxu0 %v427
    %509 = vmatpush1.msra.mxu0 %v424
    %510 = vmatprep.subr.mxu0 0.0
    %511 = vmatpush1.msra.mxu0 0.0
    %512 = vmatprep.subr.mxu0 0.0
    %513 = vmatpush1.msra.mxu0 0.0
    %514 = vmatprep.subr.mxu0 0.0
    %515 = vmatpush1.msra.mxu0 0.0
    %516 = vmatprep.subr.mxu0 0.0
    %517 = vmatpush1.msra.mxu0 0.0
    %518 = vmatprep.subr.mxu0 0.0
    %519 = vmatpush1.msra.mxu0 0.0
    %520 = vmatprep.subr.mxu0 0.0
    %521 = vmatpush1.msra.mxu0 0.0
    %522 = vmatprep.subr.mxu0 0.0
    %523 = vmatpush1.msra.mxu0 0.0
    %524 = vmatprep.subr.mxu0 0.0
    %525 = vmatpush1.msra.mxu0 0.0
    %526 = vmatprep.subr.mxu0 0.0
    %527 = vmatpush1.msra.mxu0 0.0
    %528 = vmatprep.subr.mxu0 0.0
    %529 = vmatpush1.msra.mxu0 0.0
    %530 = vmatprep.subr.mxu0 0.0
    %531 = vmatpush1.msra.mxu0 0.0
    %532 = vmatprep.subr.mxu0 0.0
    %533 = vmatpush1.msra.mxu0 0.0
    %534 = vmatprep.subr.mxu0 0.0
    %535 = vmatpush1.msra.mxu0 0.0
    %536 = vmatprep.subr.mxu0 0.0
    %537 = vmatpush1.msra.mxu0 0.0
    %538 = vmatprep.subr.mxu0 0.0
    %539 = vmatpush1.msra.mxu0 0.0
    %540 = vmatprep.subr.mxu0 0.0
    %541 = vmatpush1.msra.mxu0 0.0
    %542 = vmatprep.subr.mxu0 0.0
    %543 = vmatpush1.msra.mxu0 0.0
    %544 = vmatprep.subr.mxu0 0.0
    %545 = vmatpush1.msra.mxu0 0.0
    %546 = vmatprep.subr.mxu0 0.0
    %547 = vmatpush1.msra.mxu0 0.0
    %548 = vmatprep.subr.mxu0 0.0
    %549 = vmatpush1.msra.mxu0 0.0
    %550 = vmatprep.subr.mxu0 0.0
    %551 = vmatpush1.msra.mxu0 0.0
    %552 = vmatprep.subr.mxu0 0.0
    %553 = vmatpush1.msra.mxu0 0.0
    %554 = vmatprep.subr.mxu0 0.0
    %555 = vmatpush1.msra.mxu0 0.0
    %556 = vmatprep.subr.mxu0 0.0
    %557 = vmatpush1.msra.mxu0 0.0
    %558 = vmatprep.subr.mxu0 0.0
    %559 = vmatpush1.msra.mxu0 0.0
    %560 = vmatprep.subr.mxu0 0.0
    %561 = vmatpush1.msra.mxu0 0.0
    %562 = vmatprep.subr.mxu0 0.0
    %563 = vmatpush1.msra.mxu0 0.0
    %564 = vmatprep.mubr.f32.mxu0 0.0
    %565 = vmatmul.mubr.f32.gmra.mrb[0].mxu0 %v414
    %v566 = vpop.f32.mrb[0].mxu0
    %v567 = vadd.f32 %v81, %v566
    %v568 = vpop.f32.mrb[0].mxu0
    %v569 = vadd.f32 %v82, %v568
    %570 = vdwg.mxu0
    %v571 = vmax.f32 %v496, 0.0
    %v572 = vmax.f32 %v498, 0.0
    %v573 = vmax.f32 %v567, 0.0
    %v574 = vmax.f32 %v569, 0.0
    %v575 = vld [vmem:[%s6] sm:$0xff]
    %576 = vrot.lane.b32.xlu0 %v571, 17
    %v577 = vpop.permute.xlu0 %576
    %578 = vrot.lane.b32.xlu0 %v572, 17
    %v579 = vpop.permute.xlu0 %578
    %580 = vrot.lane.b32.xlu0 %v573, 17
    %v581 = vpop.permute.xlu0 %580
    %582 = vrot.lane.b32.xlu0 %v574, 17
    %v583 = vpop.permute.xlu0 %582
    %v584 = vsel %vm99, %v581, %v583
    %v585 = vsel %vm99, %v579, %v581
    %v586 = vsel %vm99, %v577, %v579
    %v587 = vsel %vm99, %v583, %v577
    %v588 = vld [vmem:[#allocation7] sm:$0xff]
    %v589 = vld [vmem:[#allocation7 + $0x8] sm:$0xff]
    %v590 = vld [vmem:[#allocation7 + $0x10] sm:$0xff]
    %v591 = vld [vmem:[#allocation7 + $0x18] sm:$0xff]
    %v592 = vmul.f32 %v587, %v588
    %v593 = vmul.f32 %v586, %v589
    %v594 = vmul.f32 %v585, %v590
    %v595 = vmul.f32 %v584, %v591
    %596 = vst [vmem:[#allocation2] sm:$0xff] %v592
    %597 = vst [vmem:[#allocation2 + $0x8] sm:$0xff] %v593
    %598 = vst [vmem:[#allocation2 + $0x10] sm:$0xff] %v594
    %599 = vst [vmem:[#allocation2 + $0x18] sm:$0xff] %v595
    %600 = vrot.lane.b32.xlu0 %v571, 16
    %v601 = vpop.permute.xlu0 %600
    %602 = vrot.lane.b32.xlu0 %v572, 16
    %v603 = vpop.permute.xlu0 %602
    %604 = vrot.lane.b32.xlu0 %v573, 16
    %v605 = vpop.permute.xlu0 %604
    %606 = vrot.lane.b32.xlu0 %v574, 16
    %v607 = vpop.permute.xlu0 %606
    %v608 = vsel %vm124, %v605, %v607
    %v609 = vsel %vm124, %v603, %v605
    %v610 = vsel %vm124, %v601, %v603
    %v611 = vsel %vm124, %v607, %v601
    %v612 = vld [vmem:[#allocation7 + $0x20] sm:$0xff]
    %v613 = vld [vmem:[#allocation7 + $0x28] sm:$0xff]
    %v614 = vld [vmem:[#allocation7 + $0x30] sm:$0xff]
    %v615 = vld [vmem:[#allocation7 + $0x38] sm:$0xff]
    %v616 = vmul.f32 %v611, %v612
    %v617 = vmul.f32 %v610, %v613
    %v618 = vmul.f32 %v609, %v614
    %v619 = vmul.f32 %v608, %v615
    %620 = vst [vmem:[#allocation2 + $0x20] sm:$0xff] %v616
    %621 = vst [vmem:[#allocation2 + $0x28] sm:$0xff] %v617
    %622 = vst [vmem:[#allocation2 + $0x30] sm:$0xff] %v618
    %623 = vst [vmem:[#allocation2 + $0x38] sm:$0xff] %v619
    %624 = vrot.lane.b32.xlu0 %v571, 15
    %v625 = vpop.permute.xlu0 %624
    %626 = vrot.lane.b32.xlu0 %v572, 15
    %v627 = vpop.permute.xlu0 %626
    %628 = vrot.lane.b32.xlu0 %v573, 15
    %v629 = vpop.permute.xlu0 %628
    %630 = vrot.lane.b32.xlu0 %v574, 15
    %v631 = vpop.permute.xlu0 %630
    %v632 = vsel %vm173, %v629, %v631
    %v633 = vsel %vm173, %v627, %v629
    %v634 = vsel %vm173, %v625, %v627
    %v635 = vsel %vm173, %v631, %v625
    %v636 = vld [vmem:[#allocation7 + $0x40] sm:$0xff]
    %v637 = vld [vmem:[#allocation7 + $0x48] sm:$0xff]
    %v638 = vld [vmem:[#allocation7 + $0x50] sm:$0xff]
    %v639 = vld [vmem:[#allocation7 + $0x58] sm:$0xff]
    %v640 = vmul.f32 %v635, %v636
    %v641 = vmul.f32 %v634, %v637
    %v642 = vmul.f32 %v633, %v638
    %v643 = vmul.f32 %v632, %v639
    %644 = vst [vmem:[#allocation2 + $0x40] sm:$0xff] %v640
    %645 = vst [vmem:[#allocation2 + $0x48] sm:$0xff] %v641
    %646 = vst [vmem:[#allocation2 + $0x50] sm:$0xff] %v642
    %647 = vst [vmem:[#allocation2 + $0x58] sm:$0xff] %v643
    %648 = vrot.lane.b32.xlu0 %v571, 1
    %v649 = vpop.permute.xlu0 %648
    %650 = vrot.lane.b32.xlu0 %v572, 1
    %v651 = vpop.permute.xlu0 %650
    %652 = vrot.lane.b32.xlu0 %v573, 1
    %v653 = vpop.permute.xlu0 %652
    %654 = vrot.lane.b32.xlu0 %v574, 1
    %v655 = vpop.permute.xlu0 %654
    %v656 = vsel %vm198, %v653, %v655
    %v657 = vsel %vm198, %v651, %v653
    %v658 = vsel %vm198, %v649, %v651
    %v659 = vsel %vm198, %v655, %v649
    %v660 = vld [vmem:[#allocation7 + $0x60] sm:$0xff]
    %v661 = vld [vmem:[#allocation7 + $0x68] sm:$0xff]
    %v662 = vld [vmem:[#allocation7 + $0x70] sm:$0xff]
    %v663 = vld [vmem:[#allocation7 + $0x78] sm:$0xff]
    %v664 = vmul.f32 %v659, %v660
    %v665 = vmul.f32 %v658, %v661
    %v666 = vmul.f32 %v657, %v662
    %v667 = vmul.f32 %v656, %v663
    %668 = vst [vmem:[#allocation2 + $0x60] sm:$0xff] %v664
    %669 = vst [vmem:[#allocation2 + $0x68] sm:$0xff] %v665
    %670 = vst [vmem:[#allocation2 + $0x70] sm:$0xff] %v666
    %671 = vst [vmem:[#allocation2 + $0x78] sm:$0xff] %v667
    %672 = vst [vmem:[#allocation2 + $0x80] sm:$0xff] %v571
    %673 = vst [vmem:[#allocation2 + $0x88] sm:$0xff] %v572
    %674 = vst [vmem:[#allocation2 + $0x90] sm:$0xff] %v573
    %675 = vst [vmem:[#allocation2 + $0x98] sm:$0xff] %v574
    %676 = vrot.lane.b32.xlu0 %v571, 127
    %v677 = vpop.permute.xlu0 %676
    %678 = vrot.lane.b32.xlu0 %v572, 127
    %v679 = vpop.permute.xlu0 %678
    %680 = vrot.lane.b32.xlu0 %v573, 127
    %v681 = vpop.permute.xlu0 %680
    %682 = vrot.lane.b32.xlu0 %v574, 127
    %v683 = vpop.permute.xlu0 %682
    %v684 = vsel %vm251, %v681, %v683
    %v685 = vsel %vm251, %v679, %v681
    %v686 = vsel %vm251, %v677, %v679
    %v687 = vsel %vm251, %v683, %v677
    %v688 = vld [vmem:[#allocation7 + $0xa0] sm:$0xff]
    %v689 = vld [vmem:[#allocation7 + $0xa8] sm:$0xff]
    %v690 = vld [vmem:[#allocation7 + $0xb0] sm:$0xff]
    %v691 = vld [vmem:[#allocation7 + $0xb8] sm:$0xff]
    %v692 = vmul.f32 %v686, %v688
    %v693 = vmul.f32 %v685, %v689
    %v694 = vmul.f32 %v684, %v690
    %v695 = vmul.f32 %v687, %v691
    %696 = vst [vmem:[#allocation2 + $0xa0] sm:$0xff] %v692
    %697 = vst [vmem:[#allocation2 + $0xa8] sm:$0xff] %v693
    %698 = vst [vmem:[#allocation2 + $0xb0] sm:$0xff] %v694
    %699 = vst [vmem:[#allocation2 + $0xb8] sm:$0xff] %v695
    %700 = vrot.lane.b32.xlu0 %v571, 113
    %v701 = vpop.permute.xlu0 %700
    %702 = vrot.lane.b32.xlu0 %v572, 113
    %v703 = vpop.permute.xlu0 %702
    %704 = vrot.lane.b32.xlu0 %v573, 113
    %v705 = vpop.permute.xlu0 %704
    %706 = vrot.lane.b32.xlu0 %v574, 113
    %v707 = vpop.permute.xlu0 %706
    %v708 = vsel %vm300, %v705, %v707
    %v709 = vsel %vm300, %v703, %v705
    %v710 = vsel %vm300, %v701, %v703
    %v711 = vsel %vm300, %v707, %v701
    %v712 = vld [vmem:[#allocation7 + $0xc0] sm:$0xff]
    %v713 = vld [vmem:[#allocation7 + $0xc8] sm:$0xff]
    %v714 = vld [vmem:[#allocation7 + $0xd0] sm:$0xff]
    %v715 = vld [vmem:[#allocation7 + $0xd8] sm:$0xff]
    %v716 = vmul.f32 %v710, %v712
    %v717 = vmul.f32 %v709, %v713
    %v718 = vmul.f32 %v708, %v714
    %v719 = vmul.f32 %v711, %v715
    %720 = vst [vmem:[#allocation2 + $0xc0] sm:$0xff] %v716
    %721 = vst [vmem:[#allocation2 + $0xc8] sm:$0xff] %v717
    %722 = vst [vmem:[#allocation2 + $0xd0] sm:$0xff] %v718
    %723 = vst [vmem:[#allocation2 + $0xd8] sm:$0xff] %v719
    %724 = vrot.lane.b32.xlu0 %v571, 112
    %v725 = vpop.permute.xlu0 %724
    %726 = vrot.lane.b32.xlu0 %v572, 112
    %v727 = vpop.permute.xlu0 %726
    %728 = vrot.lane.b32.xlu0 %v573, 112
    %v729 = vpop.permute.xlu0 %728
    %730 = vrot.lane.b32.xlu0 %v574, 112
    %v731 = vpop.permute.xlu0 %730
    %v732 = vsel %vm325, %v729, %v731
    %v733 = vsel %vm325, %v727, %v729
    %v734 = vsel %vm325, %v725, %v727
    %v735 = vsel %vm325, %v731, %v725
    %v736 = vld [vmem:[#allocation7 + $0xe0] sm:$0xff]
    %v737 = vld [vmem:[#allocation7 + $0xe8] sm:$0xff]
    %v738 = vld [vmem:[#allocation7 + $0xf0] sm:$0xff]
    %v739 = vld [vmem:[#allocation7 + $0xf8] sm:$0xff]
    %v740 = vmul.f32 %v734, %v736
    %v741 = vmul.f32 %v733, %v737
    %v742 = vmul.f32 %v732, %v738
    %v743 = vmul.f32 %v735, %v739
    %744 = vst [vmem:[#allocation2 + $0xe0] sm:$0xff] %v740
    %745 = vst [vmem:[#allocation2 + $0xe8] sm:$0xff] %v741
    %746 = vst [vmem:[#allocation2 + $0xf0] sm:$0xff] %v742
    %747 = vst [vmem:[#allocation2 + $0xf8] sm:$0xff] %v743
    %748 = vrot.lane.b32.xlu0 %v571, 111
    %v749 = vpop.permute.xlu0 %748
    %750 = vrot.lane.b32.xlu0 %v572, 111
    %v751 = vpop.permute.xlu0 %750
    %752 = vrot.lane.b32.xlu0 %v573, 111
    %v753 = vpop.permute.xlu0 %752
    %754 = vrot.lane.b32.xlu0 %v574, 111
    %v755 = vpop.permute.xlu0 %754
    %v756 = vsel %vm374, %v753, %v755
    %v757 = vsel %vm374, %v751, %v753
    %v758 = vsel %vm374, %v749, %v751
    %v759 = vsel %vm374, %v755, %v749
    %v760 = vld [vmem:[#allocation7 + $0x100] sm:$0xff]
    %v761 = vld [vmem:[#allocation7 + $0x108] sm:$0xff]
    %v762 = vld [vmem:[#allocation7 + $0x110] sm:$0xff]
    %v763 = vld [vmem:[#allocation7 + $0x118] sm:$0xff]
    %v764 = vmul.f32 %v758, %v760
    %v765 = vmul.f32 %v757, %v761
    %v766 = vmul.f32 %v756, %v762
    %v767 = vmul.f32 %v759, %v763
    %768 = vst [vmem:[#allocation2 + $0x100] sm:$0xff] %v764
    %769 = vst [vmem:[#allocation2 + $0x108] sm:$0xff] %v765
    %770 = vst [vmem:[#allocation2 + $0x110] sm:$0xff] %v766
    %771 = vst [vmem:[#allocation2 + $0x118] sm:$0xff] %v767
    %v772 = vld [vmem:[%s5] sm:$0xff]
    %v773 = vld [vmem:[#allocation2] sm:$0xff]
    %v774 = vld [vmem:[#allocation2 + $0x8] sm:$0xff]
    %v775 = vld [vmem:[#allocation2 + $0x10] sm:$0xff]
    %v776 = vld [vmem:[#allocation2 + $0x18] sm:$0xff]
    %v777 = vld [vmem:[#allocation2 + $0x20] sm:$0xff]
    %v778 = vld [vmem:[#allocation2 + $0x28] sm:$0xff]
    %v779 = vld [vmem:[#allocation2 + $0x30] sm:$0xff]
    %v780 = vld [vmem:[#allocation2 + $0x38] sm:$0xff]
    %v781 = vld [vmem:[#allocation2 + $0x40] sm:$0xff]
    %v782 = vld [vmem:[#allocation2 + $0x48] sm:$0xff]
    %v783 = vld [vmem:[#allocation2 + $0x50] sm:$0xff]
    %v784 = vld [vmem:[#allocation2 + $0x58] sm:$0xff]
    %v785 = vld [vmem:[#allocation2 + $0x60] sm:$0xff]
    %v786 = vld [vmem:[#allocation2 + $0x68] sm:$0xff]
    %v787 = vld [vmem:[#allocation2 + $0x70] sm:$0xff]
    %v788 = vld [vmem:[#allocation2 + $0x78] sm:$0xff]
    %v789 = vld [vmem:[#allocation2 + $0x80] sm:$0xff]
    %v790 = vld [vmem:[#allocation2 + $0x88] sm:$0xff]
    %v791 = vld [vmem:[#allocation2 + $0x90] sm:$0xff]
    %v792 = vld [vmem:[#allocation2 + $0x98] sm:$0xff]
    %v793 = vld [vmem:[#allocation2 + $0xa0] sm:$0xff]
    %v794 = vld [vmem:[#allocation2 + $0xa8] sm:$0xff]
    %v795 = vld [vmem:[#allocation2 + $0xb0] sm:$0xff]
    %v796 = vld [vmem:[#allocation2 + $0xb8] sm:$0xff]
    %v797 = vld [vmem:[#allocation2 + $0xc0] sm:$0xff]
    %v798 = vld [vmem:[#allocation2 + $0xc8] sm:$0xff]
    %v799 = vld [vmem:[#allocation2 + $0xd0] sm:$0xff]
    %v800 = vld [vmem:[#allocation2 + $0xd8] sm:$0xff]
    %v801 = vld [vmem:[#allocation2 + $0xe0] sm:$0xff]
    %v802 = vld [vmem:[#allocation2 + $0xe8] sm:$0xff]
    %v803 = vld [vmem:[#allocation2 + $0xf0] sm:$0xff]
    %v804 = vld [vmem:[#allocation2 + $0xf8] sm:$0xff]
    %v805 = vld [vmem:[#allocation2 + $0x100] sm:$0xff]
    %v806 = vld [vmem:[#allocation2 + $0x108] sm:$0xff]
    %v807 = vld [vmem:[#allocation2 + $0x110] sm:$0xff]
    %v808 = vld [vmem:[#allocation2 + $0x118] sm:$0xff]
    %810 = vset.pattern.permute.xlu0 0
    %811 = vperm.xlu0 %810, %v575
    %v812 = vpop.permute.xlu0 %811
    %vm814 = vcmask 588800
    %v816 = vsel %vm814, %v772, 0
    %818 = vmatprep.subr.mxu0 %v774
    %819 = vmatpush1.msra.mxu0 %v773
    %820 = vmatprep.subr.mxu0 %v778
    %821 = vmatpush1.msra.mxu0 %v777
    %822 = vmatprep.subr.mxu0 %v782
    %823 = vmatpush1.msra.mxu0 %v781
    %824 = vmatprep.subr.mxu0 %v786
    %825 = vmatpush1.msra.mxu0 %v785
    %826 = vmatprep.subr.mxu0 %v790
    %827 = vmatpush1.msra.mxu0 %v789
    %828 = vmatprep.subr.mxu0 %v794
    %829 = vmatpush1.msra.mxu0 %v793
    %830 = vmatprep.subr.mxu0 %v798
    %831 = vmatpush1.msra.mxu0 %v797
    %832 = vmatprep.subr.mxu0 %v802
    %833 = vmatpush1.msra.mxu0 %v801
    %834 = vmatprep.subr.mxu0 %v806
    %835 = vmatpush1.msra.mxu0 %v805
    %836 = vmatprep.subr.mxu0 0.0
    %837 = vmatpush1.msra.mxu0 0.0
    %838 = vmatprep.subr.mxu0 0.0
    %839 = vmatpush1.msra.mxu0 0.0
    %840 = vmatprep.subr.mxu0 0.0
    %841 = vmatpush1.msra.mxu0 0.0
    %842 = vmatprep.subr.mxu0 0.0
    %843 = vmatpush1.msra.mxu0 0.0
    %844 = vmatprep.subr.mxu0 0.0
    %845 = vmatpush1.msra.mxu0 0.0
    %846 = vmatprep.subr.mxu0 0.0
    %847 = vmatpush1.msra.mxu0 0.0
    %848 = vmatprep.subr.mxu0 0.0
    %849 = vmatpush1.msra.mxu0 0.0
    %850 = vmatprep.subr.mxu0 0.0
    %851 = vmatpush1.msra.mxu0 0.0
    %852 = vmatprep.subr.mxu0 0.0
    %853 = vmatpush1.msra.mxu0 0.0
    %854 = vmatprep.subr.mxu0 0.0
    %855 = vmatpush1.msra.mxu0 0.0
    %856 = vmatprep.subr.mxu0 0.0
    %857 = vmatpush1.msra.mxu0 0.0
    %858 = vmatprep.subr.mxu0 0.0
    %859 = vmatpush1.msra.mxu0 0.0
    %860 = vmatprep.subr.mxu0 0.0
    %861 = vmatpush1.msra.mxu0 0.0
    %862 = vmatprep.subr.mxu0 0.0
    %863 = vmatpush1.msra.mxu0 0.0
    %864 = vmatprep.subr.mxu0 0.0
    %865 = vmatpush1.msra.mxu0 0.0
    %866 = vmatprep.subr.mxu0 0.0
    %867 = vmatpush1.msra.mxu0 0.0
    %868 = vmatprep.subr.mxu0 0.0
    %869 = vmatpush1.msra.mxu0 0.0
    %870 = vmatprep.subr.mxu0 0.0
    %871 = vmatpush1.msra.mxu0 0.0
    %872 = vmatprep.subr.mxu0 0.0
    %873 = vmatpush1.msra.mxu0 0.0
    %874 = vmatprep.subr.mxu0 0.0
    %875 = vmatpush1.msra.mxu0 0.0
    %876 = vmatprep.subr.mxu0 0.0
    %877 = vmatpush1.msra.mxu0 0.0
    %878 = vmatprep.subr.mxu0 0.0
    %879 = vmatpush1.msra.mxu0 0.0
    %880 = vmatprep.subr.mxu0 0.0
    %881 = vmatpush1.msra.mxu0 0.0
    %882 = vmatprep.mubr.f32.mxu0 0.0
    %883 = vmatmul.mubr.f32.gmra.mrb[0].mxu0 %v816
    %v884 = vpop.f32.mrb[0].mxu0
    %v885 = vadd.f32 %v812, %v884
    %v886 = vpop.f32.mrb[0].mxu0
    %v887 = vadd.f32 %v812, %v886
    %888 = vdwg.mxu0
    %889 = vmatprep.subr.mxu0 %v776
    %890 = vmatpush1.msra.mxu0 %v775
    %891 = vmatprep.subr.mxu0 %v780
    %892 = vmatpush1.msra.mxu0 %v779
    %893 = vmatprep.subr.mxu0 %v784
    %894 = vmatpush1.msra.mxu0 %v783
    %895 = vmatprep.subr.mxu0 %v788
    %896 = vmatpush1.msra.mxu0 %v787
    %897 = vmatprep.subr.mxu0 %v792
    %898 = vmatpush1.msra.mxu0 %v791
    %899 = vmatprep.subr.mxu0 %v796
    %900 = vmatpush1.msra.mxu0 %v795
    %901 = vmatprep.subr.mxu0 %v800
    %902 = vmatpush1.msra.mxu0 %v799
    %903 = vmatprep.subr.mxu0 %v804
    %904 = vmatpush1.msra.mxu0 %v803
    %905 = vmatprep.subr.mxu0 %v808
    %906 = vmatpush1.msra.mxu0 %v807
    %907 = vmatprep.subr.mxu0 0.0
    %908 = vmatpush1.msra.mxu0 0.0
    %909 = vmatprep.subr.mxu0 0.0
    %910 = vmatpush1.msra.mxu0 0.0
    %911 = vmatprep.subr.mxu0 0.0
    %912 = vmatpush1.msra.mxu0 0.0
    %913 = vmatprep.subr.mxu0 0.0
    %914 = vmatpush1.msra.mxu0 0.0
    %915 = vmatprep.subr.mxu0 0.0
    %916 = vmatpush1.msra.mxu0 0.0
    %917 = vmatprep.subr.mxu0 0.0
    %918 = vmatpush1.msra.mxu0 0.0
    %919 = vmatprep.subr.mxu0 0.0
    %920 = vmatpush1.msra.mxu0 0.0
    %921 = vmatprep.subr.mxu0 0.0
    %922 = vmatpush1.msra.mxu0 0.0
    %923 = vmatprep.subr.mxu0 0.0
    %924 = vmatpush1.msra.mxu0 0.0
    %925 = vmatprep.subr.mxu0 0.0
    %926 = vmatpush1.msra.mxu0 0.0
    %927 = vmatprep.subr.mxu0 0.0
    %928 = vmatpush1.msra.mxu0 0.0
    %929 = vmatprep.subr.mxu0 0.0
    %930 = vmatpush1.msra.mxu0 0.0
    %931 = vmatprep.subr.mxu0 0.0
    %932 = vmatpush1.msra.mxu0 0.0
    %933 = vmatprep.subr.mxu0 0.0
    %934 = vmatpush1.msra.mxu0 0.0
    %935 = vmatprep.subr.mxu0 0.0
    %936 = vmatpush1.msra.mxu0 0.0
    %937 = vmatprep.subr.mxu0 0.0
    %938 = vmatpush1.msra.mxu0 0.0
    %939 = vmatprep.subr.mxu0 0.0
    %940 = vmatpush1.msra.mxu0 0.0
    %941 = vmatprep.subr.mxu0 0.0
    %942 = vmatpush1.msra.mxu0 0.0
    %943 = vmatprep.subr.mxu0 0.0
    %944 = vmatpush1.msra.mxu0 0.0
    %945 = vmatprep.subr.mxu0 0.0
    %946 = vmatpush1.msra.mxu0 0.0
    %947 = vmatprep.subr.mxu0 0.0
    %948 = vmatpush1.msra.mxu0 0.0
    %949 = vmatprep.subr.mxu0 0.0
    %950 = vmatpush1.msra.mxu0 0.0
    %951 = vmatprep.subr.mxu0 0.0
    %952 = vmatpush1.msra.mxu0 0.0
    %953 = vmatprep.mubr.f32.mxu0 0.0
    %954 = vmatmul.mubr.f32.gmra.mrb[0].mxu0 %v816
    %v955 = vpop.f32.mrb[0].mxu0
    %v956 = vadd.f32 %v812, %v955
    %v957 = vpop.f32.mrb[0].mxu0
    %v958 = vadd.f32 %v812, %v957
    %959 = vdwg.mxu0
    %v960 = vmax.f32 %v885, 0.0
    %v961 = vmax.f32 %v887, 0.0
    %v962 = vmax.f32 %v956, 0.0
    %v963 = vmax.f32 %v958, 0.0
    %v968 = vrot.slane %v571, 4
    %v969 = vrot.slane %v572, 4
    %v970 = vrot.slane %v573, 4
    %v971 = vrot.slane %v574, 4
    %v980 = vrot.slane %v960, 4
    %v981 = vrot.slane %v961, 4
    %v982 = vrot.slane %v962, 4
    %v983 = vrot.slane %v963, 4
    %v988 = vsel %vm416, %v77, %v968
    %v989 = vsel %vm416, %v85, %v969
    %v990 = vsel %vm416, %v78, %v970
    %v991 = vsel %vm416, %v86, %v971
    %v992 = vsel %vm416, %v968, %v980
    %v993 = vsel %vm416, %v969, %v981
    %v994 = vsel %vm416, %v970, %v982
    %v995 = vsel %vm416, %v971, %v983
    %996 = vst [vmem:[%s7] sm:$0xff] %v988
    %997 = vst [vmem:[%s7 + $0x8] sm:$0xff] %v989
    %998 = vst [vmem:[%s7 + $0x10] sm:$0xff] %v990
    %999 = vst [vmem:[%s7 + $0x18] sm:$0xff] %v991
    %1000 = vst [vmem:[%s7 + $0x20] sm:$0xff] %v992
    %1001 = vst [vmem:[%s7 + $0x28] sm:$0xff] %v993
    %1002 = vst [vmem:[%s7 + $0x30] sm:$0xff] %v994
    %1003 = vst [vmem:[%s7 + $0x38] sm:$0xff] %v995
    %1004 = vst [vmem:[%s7 + $0x40] sm:$0xf] %v980
    %1005 = vst [vmem:[%s7 + $0x48] sm:$0xf] %v981
    %1006 = vst [vmem:[%s7 + $0x50] sm:$0xf] %v982
    %1007 = vst [vmem:[%s7 + $0x58] sm:$0xf] %v983
    // Predicated region
    $region46: #{tpu_custom_call.1} parent=1 // pred_check
      _
    $region47: #{tpu_custom_call.1} parent=1 // pred_check_branch
      %1009 = sbr.rel (0) target = $region49
    $region48: #{tpu_custom_call.1} parent=1 // pred_region
      _
    $region49: #{tpu_custom_call.1} parent=1 // pred_fallthru
      _
    // Predicated region
    $region50: #{tpu_custom_call.1} parent=1 // pred_check
      _
    $region51: #{tpu_custom_call.1} parent=1 // pred_check_branch
      %1011 = sbr.rel (0) target = $region53
    $region52: #{tpu_custom_call.1} parent=1 // pred_region
      _
    $region53: #{tpu_custom_call.1} parent=1 // pred_fallthru
      _
    %1012 = vsyncpa [#allocation4], 1
    %1013 = vsyncpa [#allocation6], 1
    %1014 = vsyncpa [#allocation9], 1

</llo_original>
